<compile_context>
chip_gen: v7x
topology: tpu7x:2x2x1
jax: 0.10.0
libtpu: 0.0.40
codegen_flags: <defaults>
</compile_context>

<pallas_src>
import jax
import jax.numpy as jnp
from jax import lax
from jax.experimental import pallas as pl
from jax.experimental.pallas import tpu as pltpu

B, S, H, V = 2, 8, 32, 101     # batch, seq len, hidden, vocab (small synthetic shapes)
N = 3 * B                      # anchor + positive + negative sequences, stacked
HP = 128                       # hidden padded to one full lane width (zero-padded, exact)
SCALE = 20.0                   # CustomMultipleNegativesRankingLoss.scale
EPS = 1e-12                    # F.normalize eps used by util.cos_sim


# ---------------------------------------------------------------------------
# Fused kernel: encoder GEMM + last-token pooling + cos_sim + cross entropy.
# ---------------------------------------------------------------------------
def fused_kernel(tgt_ref, x_ref, w_ref, b_ref, loss_ref, emb_ref):
    # ---- stand-in encoder: one (3B*S, HP) @ (HP, HP) bf16 MXU GEMM, f32 acc, f32 tanh ----
    h = jnp.tanh(
        jnp.dot(x_ref[...], w_ref[...], preferred_element_type=jnp.float32)
        + b_ref[...])                                         # (N*S, HP) f32, stays in vregs

    # ---- last-token pooling as a one-hot selector matmul (no VMEM round trip) ----
    # tgt_ref[r, 0] = r*S + ((lens[r]-1) mod S) : flat row of the last attended token.
    col = lax.broadcasted_iota(jnp.int32, (N, N * S), 1)
    sel = (col == tgt_ref[...]).astype(jnp.float32)           # (N, N*S) one-hot rows
    emb = jnp.dot(sel, h, preferred_element_type=jnp.float32)  # (N, HP) pooled embeddings
    emb_ref[...] = emb                                         # single lane-dense store

    # ---- util.cos_sim(anchor, cat([pos, neg])) * scale ----
    ss = jnp.sum(emb * emb, axis=1, keepdims=True)            # (3B, 1)
    en = emb * lax.rsqrt(jnp.maximum(ss, EPS * EPS))          # x / max(||x||, eps)  (EUP)
    # NOTE: at real shapes make the per-tile B a multiple of 8 (f32) so these sublane slices
    # stay (8,128)-tile aligned; at B=2 the select cost is negligible.
    an = en[0:B, :]                                           # (B, HP)  anchors
    cn = en[B:N, :]                                           # (2B, HP) candidates [pos ; neg]
    dn = (((1,), (1,)), ((), ()))                             # contract hidden dim
    scores = lax.dot_general(an, cn, dn,
                             preferred_element_type=jnp.float32) * SCALE   # (B, 2B)

    # ---- CrossEntropyLoss(scores, arange(B)) = mean_i(logsumexp(row_i) - row_i[i]) ----
    m = jnp.max(scores, axis=1, keepdims=True)                               # (B, 1)
    lse = m + jnp.log(jnp.sum(jnp.exp(scores - m), axis=1, keepdims=True))   # (B, 1)
    rows = lax.broadcasted_iota(jnp.int32, (B, 2 * B), 0)
    cols = lax.broadcasted_iota(jnp.int32, (B, 2 * B), 1)
    diag = jnp.sum(jnp.where(rows == cols, scores, 0.0), axis=1, keepdims=True)
    loss = jnp.sum(lse - diag) / jnp.float32(B)
    loss_ref[...] = jnp.reshape(loss, (1, 1))


def triplet_simcse_forward(emb_table, w, b,
                           ids_a, mask_a, ids_p, mask_p, ids_n, mask_n):
    # ---- plain-JAX glue: one token-embedding gather on the pre-concatenated ids ----
    ids = jnp.concatenate([ids_a, ids_p, ids_n], axis=0)                   # (3B, S)
    x_flat = jnp.take(emb_table, ids, axis=0).reshape(N * S, H)            # (3B*S, H)

    # ---- last-attended-token flat indices (PyTorch wrap for lens == 0) ----
    lens = jnp.concatenate([jnp.sum(mask_a, axis=1),
                            jnp.sum(mask_p, axis=1),
                            jnp.sum(mask_n, axis=1)]).astype(jnp.int32)    # (3B,)
    tok = jnp.mod(lens - 1, S)                                             # lens==0 -> S-1
    tgt = (jnp.arange(N, dtype=jnp.int32) * S + tok).reshape(N, 1)         # (3B, 1)

    # ---- zero-pad hidden dim to a full 128-lane width (exact: pads stay 0 end to end) ----
    x_pad = jnp.pad(x_flat, ((0, 0), (0, HP - H))).astype(jnp.bfloat16)    # (3B*S, HP)
    w_pad = jnp.pad(w, ((0, HP - H), (0, HP - H))).astype(jnp.bfloat16)    # (HP, HP)
    b_pad = jnp.pad(b, ((0, 0), (0, HP - H))).astype(jnp.float32)          # (1, HP)

    flops = (2 * (N * S) * HP * HP          # encoder GEMM
             + 2 * N * (N * S) * HP         # pooling selector matmul
             + 2 * B * (2 * B) * HP)        # cos_sim scores
    transcendentals = (N * S) * HP + B * 2 * B          # tanh + exp
    bytes_accessed = (x_pad.size * 2 + w_pad.size * 2 + b_pad.size * 4
                      + tgt.size * 4 + N * HP * 4 + 4)

    loss, emb = pl.pallas_call(
        fused_kernel,
        out_shape=(
            jax.ShapeDtypeStruct((1, 1), jnp.float32),    # loss
            jax.ShapeDtypeStruct((N, HP), jnp.float32),   # [anchor ; pos ; neg] embeddings
        ),
        in_specs=[
            pl.BlockSpec(memory_space=pltpu.MemorySpace.VMEM),   # tgt indices (3B, 1) int32
            pl.BlockSpec(memory_space=pltpu.MemorySpace.VMEM),   # stacked token embeddings
            pl.BlockSpec(memory_space=pltpu.MemorySpace.VMEM),   # encoder weight (HP, HP)
            pl.BlockSpec(memory_space=pltpu.MemorySpace.VMEM),   # encoder bias   (1, HP)
        ],
        out_specs=(
            pl.BlockSpec(memory_space=pltpu.MemorySpace.VMEM),
            pl.BlockSpec(memory_space=pltpu.MemorySpace.VMEM),
        ),
        cost_estimate=pl.CostEstimate(flops=flops,
                                      transcendentals=transcendentals,
                                      bytes_accessed=bytes_accessed),
        # Scale-up path (real H/S): gridded row-tiles, emb accumulator resident, row axis
        # "parallel" (v7x 2 TCs), explicit vmem_limit_bytes, in-kernel gather via scalar
        # prefetch.  Not needed at these toy shapes.
    )(tgt, x_pad, w_pad, b_pad)

    # strip the lane padding (padded columns are exactly zero)
    return loss[0, 0], emb[0:B, :H], emb[B:2 * B, :H], emb[2 * B:3 * B, :H]


# ---------------------------------------------------------------------------
# Driver
# ---------------------------------------------------------------------------
def make_features(key):
    k_ids, k_len = jax.random.split(key)
    ids = jax.random.randint(k_ids, (B, S), 0, V, dtype=jnp.int32)
    lens = jax.random.randint(k_len, (B,), 1, S + 1, dtype=jnp.int32)
    mask = (lax.broadcasted_iota(jnp.int32, (B, S), 1) < lens[:, None]).astype(jnp.int32)
    return ids, mask


if __name__ == "__main__":
    key = jax.random.PRNGKey(0)
    k_tab, k_w, k_b, k_a, k_p, k_n = jax.random.split(key, 6)

    # deterministic synthetic parameters (stand-in backbone)
    emb_table = jax.random.normal(k_tab, (V, H), jnp.float32) * 0.1
    w = jax.random.normal(k_w, (H, H), jnp.float32) * 0.1
    b = jax.random.normal(k_b, (1, H), jnp.float32) * 0.1

    ids_a, mask_a = make_features(k_a)
    ids_p, mask_p = make_features(k_p)
    ids_n, mask_n = make_features(k_n)

    loss, a_emb, p_emb, n_emb = triplet_simcse_forward(
        emb_table, w, b, ids_a, mask_a, ids_p, mask_p, ids_n, mask_n)

    jax.block_until_ready((loss, a_emb, p_emb, n_emb))
    assert a_emb.shape == (B, H) and p_emb.shape == (B, H) and n_emb.shape == (B, H)
    assert bool(jnp.isfinite(loss))
    print("KERNEL_OK")
</pallas_src>

<mosaic_0001>
module attributes {stable_mosaic.version = 11 : i64} {
  func.func @fused_kernel(%arg0: memref<6x1xi32, #tpu.memory_space<vmem>>, %arg1: memref<48x128xbf16, #tpu.memory_space<vmem>>, %arg2: memref<128x128xbf16, #tpu.memory_space<vmem>>, %arg3: memref<1x128xf32, #tpu.memory_space<vmem>>, %arg4: memref<1x1xf32, #tpu.memory_space<vmem>>, %arg5: memref<6x128xf32, #tpu.memory_space<vmem>>) attributes {dimension_semantics = [], scalar_prefetch = 0 : i64, scratch_operands = 0 : i64, tpu.core_type = #tpu.core_type<tc>} {
    %c0 = arith.constant 0 : index
    %c0_0 = arith.constant 0 : index
    %0 = vector.load %arg1[%c0, %c0_0] : memref<48x128xbf16, #tpu.memory_space<vmem>>, vector<48x128xbf16>
    %c0_1 = arith.constant 0 : index
    %c0_2 = arith.constant 0 : index
    %1 = vector.load %arg2[%c0_1, %c0_2] : memref<128x128xbf16, #tpu.memory_space<vmem>>, vector<128x128xbf16>
    %cst = arith.constant dense<0.000000e+00> : vector<48x128xf32>
    %2 = tpu.matmul %0, %1, %cst {dimension_numbers = #tpu.dot_dimension_numbers<[1], [0], [0], [1], [0, 0, 1, 1], [], []>} : vector<48x128xbf16>, vector<128x128xbf16>, vector<48x128xf32> -> vector<48x128xf32>
    %c0_3 = arith.constant 0 : index
    %c0_4 = arith.constant 0 : index
    %3 = vector.load %arg3[%c0_3, %c0_4] : memref<1x128xf32, #tpu.memory_space<vmem>>, vector<1x128xf32>
    %4 = vector.broadcast %3 : vector<1x128xf32> to vector<48x128xf32>
    %5 = arith.addf %2, %4 : vector<48x128xf32>
    %6 = math.tanh %5 : vector<48x128xf32>
    %7 = tpu.iota {dimensions = array<i32: 1>} : vector<6x48xi32>
    %c0_5 = arith.constant 0 : index
    %c0_6 = arith.constant 0 : index
    %8 = vector.load %arg0[%c0_5, %c0_6] : memref<6x1xi32, #tpu.memory_space<vmem>>, vector<6x1xi32>
    %9 = vector.broadcast %8 : vector<6x1xi32> to vector<6x48xi32>
    %10 = arith.cmpi eq, %7, %9 : vector<6x48xi32>
    %11 = arith.extui %10 : vector<6x48xi1> to vector<6x48xi32>
    %12 = arith.sitofp %11 : vector<6x48xi32> to vector<6x48xf32>
    %cst_7 = arith.constant dense<0.000000e+00> : vector<6x128xf32>
    %13 = tpu.matmul %12, %6, %cst_7 {dimension_numbers = #tpu.dot_dimension_numbers<[1], [0], [0], [1], [0, 0, 1, 1], [], []>} : vector<6x48xf32>, vector<48x128xf32>, vector<6x128xf32> -> vector<6x128xf32>
    %c0_8 = arith.constant 0 : index
    %c0_9 = arith.constant 0 : index
    %14 = vector.load %arg5[%c0_8, %c0_9] : memref<6x128xf32, #tpu.memory_space<vmem>>, vector<6x128xf32>
    tpu.vector_store %arg5[%c0_8, %c0_9], %13 {strides = array<i32>} : memref<6x128xf32, #tpu.memory_space<vmem>>, vector<6x128xf32>,
    %15 = arith.mulf %13, %13 : vector<6x128xf32>
    %cst_10 = arith.constant dense<0.000000e+00> : vector<6xf32>
    %16 = vector.multi_reduction <add>, %15, %cst_10 [1] : vector<6x128xf32> to vector<6xf32>
    %17 = vector.shape_cast %16 : vector<6xf32> to vector<6x1xf32>
    %cst_11 = arith.constant 1.000000e-24 : f32
    %18 = vector.broadcast %cst_11 : f32 to vector<6x1xf32>
    %19 = arith.maximumf %17, %18 : vector<6x1xf32>
    %20 = math.rsqrt %19 : vector<6x1xf32>
    %21 = vector.broadcast %20 : vector<6x1xf32> to vector<6x128xf32>
    %22 = arith.mulf %13, %21 : vector<6x128xf32>
    %23 = vector.extract_strided_slice %22 {offsets = [0, 0], sizes = [2, 128], strides = [1, 1]} : vector<6x128xf32> to vector<2x128xf32>
    %24 = vector.extract_strided_slice %22 {offsets = [2, 0], sizes = [4, 128], strides = [1, 1]} : vector<6x128xf32> to vector<4x128xf32>
    %cst_12 = arith.constant dense<0.000000e+00> : vector<2x4xf32>
    %25 = tpu.matmul %23, %24, %cst_12 {dimension_numbers = #tpu.dot_dimension_numbers<[1], [1], [0], [0], [0, 0, 1, 0], [], []>} : vector<2x128xf32>, vector<4x128xf32>, vector<2x4xf32> -> vector<2x4xf32>
    %cst_13 = arith.constant 2.000000e+01 : f32
    %26 = vector.broadcast %cst_13 : f32 to vector<2x4xf32>
    %27 = arith.mulf %25, %26 : vector<2x4xf32>
    %cst_14 = arith.constant dense<0xFF800000> : vector<2xf32>
    %28 = vector.multi_reduction <maximumf>, %27, %cst_14 [1] : vector<2x4xf32> to vector<2xf32>
    %29 = vector.shape_cast %28 : vector<2xf32> to vector<2x1xf32>
    %30 = vector.broadcast %29 : vector<2x1xf32> to vector<2x4xf32>
    %31 = arith.subf %27, %30 : vector<2x4xf32>
    %32 = math.exp %31 : vector<2x4xf32>
    %cst_15 = arith.constant dense<0.000000e+00> : vector<2xf32>
    %33 = vector.multi_reduction <add>, %32, %cst_15 [1] : vector<2x4xf32> to vector<2xf32>
    %34 = vector.shape_cast %33 : vector<2xf32> to vector<2x1xf32>
    %35 = math.log %34 : vector<2x1xf32>
    %36 = arith.addf %29, %35 : vector<2x1xf32>
    %37 = tpu.iota {dimensions = array<i32: 0>} : vector<2x4xi32>
    %38 = tpu.iota {dimensions = array<i32: 1>} : vector<2x4xi32>
    %39 = arith.cmpi eq, %37, %38 : vector<2x4xi32>
    %cst_16 = arith.constant 0.000000e+00 : f32
    %40 = vector.broadcast %cst_16 : f32 to vector<2x4xf32>
    %41 = arith.select %39, %27, %40 : vector<2x4xi1>, vector<2x4xf32>
    %cst_17 = arith.constant dense<0.000000e+00> : vector<2xf32>
    %42 = vector.multi_reduction <add>, %41, %cst_17 [1] : vector<2x4xf32> to vector<2xf32>
    %43 = vector.shape_cast %42 : vector<2xf32> to vector<2x1xf32>
    %44 = arith.subf %36, %43 : vector<2x1xf32>
    %45 = vector.shape_cast %44 : vector<2x1xf32> to vector<1x2x1xf32>
    %cst_18 = arith.constant dense<0.000000e+00> : vector<1xf32>
    %46 = vector.multi_reduction <add>, %45, %cst_18 [1, 2] : vector<1x2x1xf32> to vector<1xf32>
    %47 = vector.shape_cast %46 : vector<1xf32> to vector<1x1x1xf32>
    %48 = vector.extract %47[0, 0, 0] : f32 from vector<1x1x1xf32>
    %cst_19 = arith.constant 2.000000e+00 : f32
    %49 = arith.divf %48, %cst_19 : f32
    %50 = vector.broadcast %49 : f32 to vector<1x1xf32>
    %c0_20 = arith.constant 0 : index
    %c0_21 = arith.constant 0 : index
    %51 = vector.load %arg4[%c0_20, %c0_21] : memref<1x1xf32, #tpu.memory_space<vmem>>, vector<1x1xf32>
    tpu.vector_store %arg4[%c0_20, %c0_21], %50 {strides = array<i32>} : memref<1x1xf32, #tpu.memory_space<vmem>>, vector<1x1xf32>,
    return
  }
}

</mosaic_0001>

<llo_original>
// kernel: tpu_custom_call.1
$region0: #{tpu_custom_call.1}
  #allocation0 [shape = 'u32[]', space=smem, size = 0x4, offset = 0x4, fixed_abs, tag = 'smem constant byte address 0x4 - core index']
  #allocation1 [shape = 'u32[144,128]{1,0:T(1,128)}', space=vmem, size = 0x12000, scoped, tag = 'internal scratch']
  %s0 = inlined_call_operand.vmem [shape: s32[6,1], index: 0, kind: input, shape index: {}]
  %s1 = inlined_call_operand.hbm [shape: bf16[48,128], index: 1, kind: input, shape index: {}]
  %s2 = inlined_call_operand.hbm [shape: bf16[128,128], index: 2, kind: input, shape index: {}]
  %s3 = inlined_call_operand.vmem [shape: f32[1,128], index: 3, kind: input, shape index: {}]
  %s4 = inlined_call_operand.hbm [shape: f32[1,1], index: 4, kind: output, shape index: {0}]
  %s5 = inlined_call_operand.hbm [shape: f32[6,128], index: 5, kind: output, shape index: {1}]
  %6 = xla_tuple %s4, %s5
  %s7 = sld [smem:[#allocation0]]
  $region42: #{tpu_custom_call.1} parent=0
    _
  %s9 = ssub.s32 1, %s7
  %s10 = scalar_select 0, %s9, %s7
  $region1: #{tpu_custom_call.1} parent=0
    #allocation2 [shape = 'u8[12288]{0}', space=vmem, size = 0x3000, scoped, tag = 'input window, operand 1, single buffered']
    #allocation3 [shape = 's32[1]{0}', space=sflag, size = 0x4, scoped, tag = 'scoped memory for tpu_custom_call.1']
    #allocation4 [shape = 's32[1]{0}', space=sflag, size = 0x4, scoped, tag = 'scoped memory for tpu_custom_call.1']
    #allocation5 [shape = 'u8[32768]{0}', space=vmem, size = 0x8000, scoped, tag = 'input window, operand 2, single buffered']
    #allocation6 [shape = 's32[1]{0}', space=sflag, size = 0x4, scoped, tag = 'scoped memory for tpu_custom_call.1']
    #allocation7 [shape = 'u8[512]{0}', space=vmem, size = 0x400, scoped, tag = 'output window, operand 0, single buffered']
    #allocation8 [shape = 'u8[4096]{0}', space=vmem, size = 0x1000, scoped, tag = 'output window, operand 1, single buffered']
    #allocation9 [shape = 's32[1]{0}', space=sflag, size = 0x4, scoped, tag = 'scoped memory for tpu_custom_call.1']
    %11 = vsyncpa [#allocation3], 0
    %12 = vsyncpa [#allocation6], 0
    %13 = vsyncpa [#allocation4], 0
    %14 = vsyncpa [#allocation9], 0
    // Predicated region
    $region2: #{tpu_custom_call.1} parent=1 // pred_check
      _
    $region3: #{tpu_custom_call.1} parent=1 // pred_check_branch
      %16 = sbr.rel (0) target = $region5
    $region4: #{tpu_custom_call.1} parent=1 // pred_region
      _
    $region5: #{tpu_custom_call.1} parent=1 // pred_fallthru
      _
    // Predicated region
    $region6: #{tpu_custom_call.1} parent=1 // pred_check
      _
    $region7: #{tpu_custom_call.1} parent=1 // pred_check_branch
      %18 = sbr.rel (0) target = $region9
    $region8: #{tpu_custom_call.1} parent=1 // pred_region
      %s20 = ssub.s32 384, 384
      %21 = vsyncadd [#allocation3], %s20
      %s22 = sshll.u32 [#allocation2], 4
      %s23 = int_to_ptr.vmem [resolvable:$true] %s22
      %28 = dma.hbm_to_vmem [thread:$0]  %s1, 384, %s23, [#allocation3], 64, 64, 4
    $region9: #{tpu_custom_call.1} parent=1 // pred_fallthru
      _
    // Predicated region
    $region10: #{tpu_custom_call.1} parent=1 // pred_check
      _
    $region11: #{tpu_custom_call.1} parent=1 // pred_check_branch
      %30 = sbr.rel (0) target = $region13
    $region12: #{tpu_custom_call.1} parent=1 // pred_region
      %s32 = ssub.s32 1024, 1024
      %33 = vsyncadd [#allocation6], %s32
      %s34 = sshll.u32 [#allocation5], 4
      %s35 = int_to_ptr.vmem [resolvable:$true] %s34
      %40 = dma.hbm_to_vmem [thread:$0]  %s2, 1024, %s35, [#allocation6], 64, 64, 4
    $region13: #{tpu_custom_call.1} parent=1 // pred_fallthru
      _
    // Predicated region
    $region14: #{tpu_custom_call.1} parent=1 // pred_check
      _
    $region15: #{tpu_custom_call.1} parent=1 // pred_check_branch
      %42 = sbr.rel (0) target = $region17
    $region16: #{tpu_custom_call.1} parent=1 // pred_region
      _
    $region17: #{tpu_custom_call.1} parent=1 // pred_fallthru
      _
    // Predicated region
    $region18: #{tpu_custom_call.1} parent=1 // pred_check
      _
    $region19: #{tpu_custom_call.1} parent=1 // pred_check_branch
      %44 = sbr.rel (0) target = $region21
    $region20: #{tpu_custom_call.1} parent=1 // pred_region
      %45 = dma.done [#allocation3], 384
    $region21: #{tpu_custom_call.1} parent=1 // pred_fallthru
      _
    // Predicated region
    $region22: #{tpu_custom_call.1} parent=1 // pred_check
      _
    $region23: #{tpu_custom_call.1} parent=1 // pred_check_branch
      %47 = sbr.rel (0) target = $region25
    $region24: #{tpu_custom_call.1} parent=1 // pred_region
      %48 = dma.done [#allocation6], 1024
    $region25: #{tpu_custom_call.1} parent=1 // pred_fallthru
      _
    %v50 = vld [vmem:[#allocation2] sm:$0xf]
    %v51 = vld [vmem:[#allocation2 + $0x4] sm:$0xf]
    %v52 = vld [vmem:[#allocation2 + $0x8] sm:$0xf]
    %v53 = vld [vmem:[#allocation2 + $0xc] sm:$0xf]
    %v54 = vld [vmem:[#allocation2 + $0x10] sm:$0xf]
    %v55 = vld [vmem:[#allocation2 + $0x14] sm:$0xf]
    %v56 = vld [vmem:[#allocation5] sm:$0xf]
    %v57 = vld [vmem:[#allocation5 + $0x4] sm:$0xf]
    %v58 = vld [vmem:[#allocation5 + $0x8] sm:$0xf]
    %v59 = vld [vmem:[#allocation5 + $0xc] sm:$0xf]
    %v60 = vld [vmem:[#allocation5 + $0x10] sm:$0xf]
    %v61 = vld [vmem:[#allocation5 + $0x14] sm:$0xf]
    %v62 = vld [vmem:[#allocation5 + $0x18] sm:$0xf]
    %v63 = vld [vmem:[#allocation5 + $0x1c] sm:$0xf]
    %v64 = vld [vmem:[#allocation5 + $0x20] sm:$0xf]
    %v65 = vld [vmem:[#allocation5 + $0x24] sm:$0xf]
    %v66 = vld [vmem:[#allocation5 + $0x28] sm:$0xf]
    %v67 = vld [vmem:[#allocation5 + $0x2c] sm:$0xf]
    %v68 = vld [vmem:[#allocation5 + $0x30] sm:$0xf]
    %v69 = vld [vmem:[#allocation5 + $0x34] sm:$0xf]
    %v70 = vld [vmem:[#allocation5 + $0x38] sm:$0xf]
    %v71 = vld [vmem:[#allocation5 + $0x3c] sm:$0xf]
    %v72 = vld [vmem:[%s3] sm:$0x1]
    %v74 = vlaneseq
    %v75 = vshrl.u32 %v74, 7
    %v76 = vsub.s32 0, %v75
    %v77 = vrot.slane %v72, %v76
    %v85 = vunpack.c.l.b16 %v50
    %v86 = vunpack.c.l.b16 %v51
    %v87 = vunpack.c.l.b16 %v52
    %v88 = vunpack.c.l.b16 %v53
    %v89 = vunpack.c.l.b16 %v54
    %v90 = vunpack.c.l.b16 %v55
    %v91 = vpack.c.b16 %v86, %v85
    %v92 = vpack.c.b16 %v88, %v87
    %v93 = vpack.c.b16 %v90, %v89
    %v113 = vunpack.c.l.b16 %v56
    %v114 = vunpack.c.l.b16 %v57
    %v115 = vunpack.c.l.b16 %v58
    %v116 = vunpack.c.l.b16 %v59
    %v117 = vunpack.c.l.b16 %v60
    %v118 = vunpack.c.l.b16 %v61
    %v119 = vunpack.c.l.b16 %v62
    %v120 = vunpack.c.l.b16 %v63
    %v121 = vunpack.c.l.b16 %v64
    %v122 = vunpack.c.l.b16 %v65
    %v123 = vunpack.c.l.b16 %v66
    %v124 = vunpack.c.l.b16 %v67
    %v125 = vunpack.c.l.b16 %v68
    %v126 = vunpack.c.l.b16 %v69
    %v127 = vunpack.c.l.b16 %v70
    %v128 = vunpack.c.l.b16 %v71
    %v129 = vpack.c.b16 %v114, %v113
    %v130 = vpack.c.b16 %v116, %v115
    %v131 = vpack.c.b16 %v118, %v117
    %v132 = vpack.c.b16 %v120, %v119
    %v133 = vpack.c.b16 %v122, %v121
    %v134 = vpack.c.b16 %v124, %v123
    %v135 = vpack.c.b16 %v126, %v125
    %v136 = vpack.c.b16 %v128, %v127
    %145 = vmatprep.subr.bf16.mxu0 0
    %146 = vmatpush1.bf16.msra.mxu0 %v129
    %147 = vmatprep.subr.bf16.mxu0 0
    %148 = vmatpush1.bf16.msra.mxu0 %v130
    %149 = vmatprep.subr.bf16.mxu0 0
    %150 = vmatpush1.bf16.msra.mxu0 %v131
    %151 = vmatprep.subr.bf16.mxu0 0
    %152 = vmatpush1.bf16.msra.mxu0 %v132
    %153 = vmatprep.subr.bf16.mxu0 0
    %154 = vmatpush1.bf16.msra.mxu0 %v133
    %155 = vmatprep.subr.bf16.mxu0 0
    %156 = vmatpush1.bf16.msra.mxu0 %v134
    %157 = vmatprep.subr.bf16.mxu0 0
    %158 = vmatpush1.bf16.msra.mxu0 %v135
    %159 = vmatprep.subr.bf16.mxu0 0
    %160 = vmatpush1.bf16.msra.mxu0 %v136
    %161 = vmatprep.subr.bf16.mxu0 0
    %162 = vmatpush1.bf16.msra.mxu0 0
    %163 = vmatprep.subr.bf16.mxu0 0
    %164 = vmatpush1.bf16.msra.mxu0 0
    %165 = vmatprep.subr.bf16.mxu0 0
    %166 = vmatpush1.bf16.msra.mxu0 0
    %167 = vmatprep.subr.bf16.mxu0 0
    %168 = vmatpush1.bf16.msra.mxu0 0
    %169 = vmatprep.subr.bf16.mxu0 0
    %170 = vmatpush1.bf16.msra.mxu0 0
    %171 = vmatprep.subr.bf16.mxu0 0
    %172 = vmatpush1.bf16.msra.mxu0 0
    %173 = vmatprep.subr.bf16.mxu0 0
    %174 = vmatpush1.bf16.msra.mxu0 0
    %175 = vmatprep.subr.bf16.mxu0 0
    %176 = vmatpush1.bf16.msra.mxu0 0
    %177 = vmatprep.mubr.bf16.mxu0 0
    %178 = vmatmul.mubr.bf16.gmra.mrb[0].mxu0 %v91
    %v179 = vpop.f32.mrb[0].mxu0
    %v180 = vadd.f32 %v77, %v179
    %v181 = vpop.f32.mrb[0].mxu0
    %v182 = vpop.f32.mrb[0].mxu0
    %v183 = vadd.f32 %v77, %v182
    %v184 = vpop.f32.mrb[0].mxu0
    %185 = vmatprep.mubr.bf16.mxu0 0
    %186 = vmatmul.mubr.bf16.gmra.mrb[0].mxu0 %v92
    %v187 = vpop.f32.mrb[0].mxu0
    %v188 = vadd.f32 %v77, %v187
    %v189 = vpop.f32.mrb[0].mxu0
    %v190 = vpop.f32.mrb[0].mxu0
    %v191 = vadd.f32 %v77, %v190
    %v192 = vpop.f32.mrb[0].mxu0
    %193 = vmatprep.mubr.bf16.mxu0 0
    %194 = vmatmul.mubr.bf16.gmra.mrb[0].mxu0 %v93
    %v195 = vpop.f32.mrb[0].mxu0
    %v196 = vadd.f32 %v77, %v195
    %v197 = vpop.f32.mrb[0].mxu0
    %v198 = vpop.f32.mrb[0].mxu0
    %v199 = vadd.f32 %v77, %v198
    %v200 = vpop.f32.mrb[0].mxu0
    %201 = vdwg.mxu0
    %v202 = vtanh.pop %v180
    %v203 = vtanh.pop %v183
    %v204 = vtanh.pop %v188
    %v205 = vtanh.pop %v191
    %v206 = vtanh.pop %v196
    %v207 = vtanh.pop %v199
    %v208 = vlaneseq
    %v209 = vand.u32 %v208, 127
    %v210 = vld [vmem:[%s0] sm:$0x3f]
    %211 = vset.pattern.permute.xlu0 0
    %212 = vperm.xlu0 %211, %v210
    %v213 = vpop.permute.xlu0 %212
    %vm214 = vcmp.eq.s32.totalorder %v209, %v213
    %v215 = vsel %vm214, 1, 0
    %v216 = vcvt.s32.f32 %v215
    %vm217 = vcmask 392192
    %v219 = vsel %vm217, %v216, 0
    %221 = vmatprep.subr.mxu0 0.0
    %222 = vmatpush1.msra.mxu0 %v202
    %223 = vmatprep.subr.mxu0 0.0
    %224 = vmatpush1.msra.mxu0 %v203
    %225 = vmatprep.subr.mxu0 0.0
    %226 = vmatpush1.msra.mxu0 %v204
    %227 = vmatprep.subr.mxu0 0.0
    %228 = vmatpush1.msra.mxu0 %v205
    %229 = vmatprep.subr.mxu0 0.0
    %230 = vmatpush1.msra.mxu0 %v206
    %231 = vmatprep.subr.mxu0 0.0
    %232 = vmatpush1.msra.mxu0 %v207
    %233 = vmatprep.subr.mxu0 0.0
    %234 = vmatpush1.msra.mxu0 0.0
    %235 = vmatprep.subr.mxu0 0.0
    %236 = vmatpush1.msra.mxu0 0.0
    %237 = vmatprep.subr.mxu0 0.0
    %238 = vmatpush1.msra.mxu0 0.0
    %239 = vmatprep.subr.mxu0 0.0
    %240 = vmatpush1.msra.mxu0 0.0
    %241 = vmatprep.subr.mxu0 0.0
    %242 = vmatpush1.msra.mxu0 0.0
    %243 = vmatprep.subr.mxu0 0.0
    %244 = vmatpush1.msra.mxu0 0.0
    %245 = vmatprep.subr.mxu0 0.0
    %246 = vmatpush1.msra.mxu0 0.0
    %247 = vmatprep.subr.mxu0 0.0
    %248 = vmatpush1.msra.mxu0 0.0
    %249 = vmatprep.subr.mxu0 0.0
    %250 = vmatpush1.msra.mxu0 0.0
    %251 = vmatprep.subr.mxu0 0.0
    %252 = vmatpush1.msra.mxu0 0.0
    %253 = vmatprep.subr.mxu0 0.0
    %254 = vmatpush1.msra.mxu0 0.0
    %255 = vmatprep.subr.mxu0 0.0
    %256 = vmatpush1.msra.mxu0 0.0
    %257 = vmatprep.subr.mxu0 0.0
    %258 = vmatpush1.msra.mxu0 0.0
    %259 = vmatprep.subr.mxu0 0.0
    %260 = vmatpush1.msra.mxu0 0.0
    %261 = vmatprep.subr.mxu0 0.0
    %262 = vmatpush1.msra.mxu0 0.0
    %263 = vmatprep.subr.mxu0 0.0
    %264 = vmatpush1.msra.mxu0 0.0
    %265 = vmatprep.subr.mxu0 0.0
    %266 = vmatpush1.msra.mxu0 0.0
    %267 = vmatprep.subr.mxu0 0.0
    %268 = vmatpush1.msra.mxu0 0.0
    %269 = vmatprep.subr.mxu0 0.0
    %270 = vmatpush1.msra.mxu0 0.0
    %271 = vmatprep.subr.mxu0 0.0
    %272 = vmatpush1.msra.mxu0 0.0
    %273 = vmatprep.subr.mxu0 0.0
    %274 = vmatpush1.msra.mxu0 0.0
    %275 = vmatprep.subr.mxu0 0.0
    %276 = vmatpush1.msra.mxu0 0.0
    %277 = vmatprep.subr.mxu0 0.0
    %278 = vmatpush1.msra.mxu0 0.0
    %279 = vmatprep.subr.mxu0 0.0
    %280 = vmatpush1.msra.mxu0 0.0
    %281 = vmatprep.subr.mxu0 0.0
    %282 = vmatpush1.msra.mxu0 0.0
    %283 = vmatprep.subr.mxu0 0.0
    %284 = vmatpush1.msra.mxu0 0.0
    %285 = vmatprep.mubr.f32.mxu0 0.0
    %286 = vmatmul.mubr.f32.gmra.mrb[0].mxu0 %v219
    %v287 = vpop.f32.mrb[0].mxu0
    %v288 = vadd.f32 0.0, %v287
    %v289 = vpop.f32.mrb[0].mxu0
    %290 = vdwg.mxu0
    %291 = vst [vmem:[#allocation8] sm:$0x3f] %v288
    %v292 = vmul.f32 %v288, %v288
    %vm293 = vcmask 1045504
    %v294 = vsel %vm293, %v292, 0.0
    %295 = vadd.xlane.f32.xlu0 %v294
    %v296 = vpop.xlane.xlu0 %295
    %v297 = vmax.f32 %v296, 1e-24
    %v298 = vrsqrt.pop %v297
    %v299 = vmul.f32 %v288, %v298
    %v301 = vrot.slane %v299, 2
    %303 = vmatprep.subr.mxu0 0.0
    %304 = vmatpush1.xpose.msra.mxu0 %v301
    %305 = vmatprep.subr.mxu0 0.0
    %306 = vmatpush1.xpose.msra.mxu0 0.0
    %307 = vmatprep.subr.mxu0 0.0
    %308 = vmatpush1.xpose.msra.mxu0 0.0
    %309 = vmatprep.subr.mxu0 0.0
    %310 = vmatpush1.xpose.msra.mxu0 0.0
    %311 = vmatprep.subr.mxu0 0.0
    %312 = vmatpush1.xpose.msra.mxu0 0.0
    %313 = vmatprep.subr.mxu0 0.0
    %314 = vmatpush1.xpose.msra.mxu0 0.0
    %315 = vmatprep.subr.mxu0 0.0
    %316 = vmatpush1.xpose.msra.mxu0 0.0
    %317 = vmatprep.subr.mxu0 0.0
    %318 = vmatpush1.xpose.msra.mxu0 0.0
    %319 = vmatprep.subr.mxu0 0.0
    %320 = vmatpush1.xpose.msra.mxu0 0.0
    %321 = vmatprep.subr.mxu0 0.0
    %322 = vmatpush1.xpose.msra.mxu0 0.0
    %323 = vmatprep.subr.mxu0 0.0
    %324 = vmatpush1.xpose.msra.mxu0 0.0
    %325 = vmatprep.subr.mxu0 0.0
    %326 = vmatpush1.xpose.msra.mxu0 0.0
    %327 = vmatprep.subr.mxu0 0.0
    %328 = vmatpush1.xpose.msra.mxu0 0.0
    %329 = vmatprep.subr.mxu0 0.0
    %330 = vmatpush1.xpose.msra.mxu0 0.0
    %331 = vmatprep.subr.mxu0 0.0
    %332 = vmatpush1.xpose.msra.mxu0 0.0
    %333 = vmatprep.subr.mxu0 0.0
    %334 = vmatpush1.xpose.msra.mxu0 0.0
    %335 = vmatprep.subr.mxu0 0.0
    %336 = vmatpush1.xpose.msra.mxu0 0.0
    %337 = vmatprep.subr.mxu0 0.0
    %338 = vmatpush1.xpose.msra.mxu0 0.0
    %339 = vmatprep.subr.mxu0 0.0
    %340 = vmatpush1.xpose.msra.mxu0 0.0
    %341 = vmatprep.subr.mxu0 0.0
    %342 = vmatpush1.xpose.msra.mxu0 0.0
    %343 = vmatprep.subr.mxu0 0.0
    %344 = vmatpush1.xpose.msra.mxu0 0.0
    %345 = vmatprep.subr.mxu0 0.0
    %346 = vmatpush1.xpose.msra.mxu0 0.0
    %347 = vmatprep.subr.mxu0 0.0
    %348 = vmatpush1.xpose.msra.mxu0 0.0
    %349 = vmatprep.subr.mxu0 0.0
    %350 = vmatpush1.xpose.msra.mxu0 0.0
    %351 = vmatprep.subr.mxu0 0.0
    %352 = vmatpush1.xpose.msra.mxu0 0.0
    %353 = vmatprep.subr.mxu0 0.0
    %354 = vmatpush1.xpose.msra.mxu0 0.0
    %355 = vmatprep.subr.mxu0 0.0
    %356 = vmatpush1.xpose.msra.mxu0 0.0
    %357 = vmatprep.subr.mxu0 0.0
    %358 = vmatpush1.xpose.msra.mxu0 0.0
    %359 = vmatprep.subr.mxu0 0.0
    %360 = vmatpush1.xpose.msra.mxu0 0.0
    %361 = vmatprep.subr.mxu0 0.0
    %362 = vmatpush1.xpose.msra.mxu0 0.0
    %363 = vmatprep.subr.mxu0 0.0
    %364 = vmatpush1.xpose.msra.mxu0 0.0
    %365 = vmatprep.subr.mxu0 0.0
    %366 = vmatpush1.xpose.msra.mxu0 0.0
    %367 = vmatprep.mubr.f32.mxu0 0.0
    %368 = vmatmul.mubr.f32.gmra.mrb[0].mxu0 %v299
    %v369 = vpop.f32.mrb[0].mxu0
    %v370 = vadd.f32 0.0, %v369
    %v371 = vpop.f32.mrb[0].mxu0
    %372 = vdwg.mxu0
    %v373 = vmul.f32 %v370, 20.0
    %vm374 = vcmask 25600
    %v375 = vsel %vm374, %v373, -inf
    %376 = vmax.xlane.f32.xlu0 %v375
    %v377 = vpop.xlane.xlu0 %376
    %v378 = vsub.f32 %v373, %v377
    %v379 = vmul.f32 %v378, 1.442695
    %v380 = vpow.pop %v379
    %v381 = vsel %vm374, %v380, 0.0
    %382 = vadd.xlane.f32.xlu0 %v381
    %v383 = vpop.xlane.xlu0 %382
    %v384 = vlog2.pop %v383
    %v385 = vmul.f32 %v384, 0.6931472
    %v386 = vadd.f32 %v377, %v385
    %v387 = vlaneseq
    %v388 = vshrl.u32 %v387, 7
    %vm389 = vcmp.eq.s32.totalorder %v388, %v209
    %v390 = vsel %vm389, %v373, 0.0
    %v391 = vsel %vm374, %v390, 0.0
    %392 = vadd.xlane.f32.xlu0 %v391
    %v393 = vpop.xlane.xlu0 %392
    %v394 = vsub.f32 %v386, %v393
    %vm395 = vcmask 1024
    %v396 = vsel %vm395, %v394, 0.0
    %397 = vadd.xlane.f32.xlu0 %v396
    %v398 = vpop.xlane.xlu0 %397
    %v399 = vrot.slane %v398, 4
    %v400 = vadd.f32 %v398, %v399
    %v401 = vrot.slane %v400, 2
    %v402 = vadd.f32 %v400, %v401
    %v403 = vrot.slane %v402, 1
    %v404 = vadd.f32 %v402, %v403
    %s405 = vtos %v404
    %v406 = vrcp.pop 2.0
    %s407 = vtos %v406
    %s408 = smul.f32 %s405, %s407
    %v409 = vstv %s408
    %vm410 = vcmask 0
    %411 = vst.msk [vmem:[#allocation7] sm:$0x1] %vm410, %v409
    // Predicated region
    $region26: #{tpu_custom_call.1} parent=1 // pred_check
      _
    $region27: #{tpu_custom_call.1} parent=1 // pred_check_branch
      %413 = sbr.rel (0) target = $region29
    $region28: #{tpu_custom_call.1} parent=1 // pred_region
      %s415 = ssub.s32 16, 16
      %416 = vsyncadd [#allocation4], %s415
      %s418 = sshll.u32 [#allocation7], 4
      %s419 = int_to_ptr.vmem [resolvable:$true] %s418
      %421 = dma.vmem_to_hbm [thread:$0]  %s419, 16, %s4, [#allocation4]
    $region29: #{tpu_custom_call.1} parent=1 // pred_fallthru
      _
    // Predicated region
    $region30: #{tpu_custom_call.1} parent=1 // pred_check
      _
    $region31: #{tpu_custom_call.1} parent=1 // pred_check_branch
      %423 = sbr.rel (0) target = $region33
    $region32: #{tpu_custom_call.1} parent=1 // pred_region
      %s425 = ssub.s32 128, 128
      %426 = vsyncadd [#allocation9], %s425
      %s428 = sshll.u32 [#allocation8], 4
      %s429 = int_to_ptr.vmem [resolvable:$true] %s428
      %431 = dma.vmem_to_hbm [thread:$0]  %s429, 128, %s5, [#allocation9]
    $region33: #{tpu_custom_call.1} parent=1 // pred_fallthru
      _
    // Predicated region
    $region34: #{tpu_custom_call.1} parent=1 // pred_check
      _
    $region35: #{tpu_custom_call.1} parent=1 // pred_check_branch
      %433 = sbr.rel (0) target = $region37
    $region36: #{tpu_custom_call.1} parent=1 // pred_region
      %434 = dma.done [#allocation4], 16
    $region37: #{tpu_custom_call.1} parent=1 // pred_fallthru
      _
    // Predicated region
    $region38: #{tpu_custom_call.1} parent=1 // pred_check
      _
    $region39: #{tpu_custom_call.1} parent=1 // pred_check_branch
      %436 = sbr.rel (0) target = $region41
    $region40: #{tpu_custom_call.1} parent=1 // pred_region
      %437 = dma.done [#allocation9], 128
    $region41: #{tpu_custom_call.1} parent=1 // pred_fallthru
      _
    %438 = vsyncpa [#allocation3], 1
    %439 = vsyncpa [#allocation6], 1
    %440 = vsyncpa [#allocation4], 1
    %441 = vsyncpa [#allocation9], 1

</llo_original>
